<compile_context>
chip_gen: v6e
topology: v6e:2x2x1
jax: 0.10.0
libtpu: 0.0.40
codegen_flags: <defaults>
</compile_context>

<pallas_src>
import jax
import jax.numpy as jnp
from jax.experimental import pallas as pl
from jax.experimental.pallas import tpu as pltpu

_LANES = 128
# Candidate lane widths for the 2-D slab, widest first (all multiples of 128 so
# every store is an unmasked full-lane vst).
_LANE_CANDIDATES = (1024, 512, 256, 128)
# Per-block byte budget. in + out, double-buffered => 4x this resident in VMEM
# (8 MiB), which fits the default scoped-VMEM budget on v5e (16 MiB), v6e
# (32 MiB) and v7x (32 MiB of its 64 MiB) without raising vmem_limit_bytes,
# while staying on the measured ~85% HBM-roofline plateau for streaming copies.
_MAX_BLOCK_BYTES = 2 * 1024 * 1024
# Sublane alignment safe for every dtype (f32 needs 8, bf16 16, int8/fp8 32).
_SUBLANE = 32


def _identity_copy_kernel(x_ref, o_ref):
    # Pure streaming copy: one vld + one vst per vreg; HBM-bandwidth bound.
    o_ref[...] = x_ref[...]


def _pick_tile_rows(rows, max_rows):
    """Largest legal row-tile: full extent if it fits the VMEM budget, else the
    biggest multiple-of-32 divisor of `rows` that fits. Returns None if no
    clean tiling exists (caller then tries another lane width or pads)."""
    if rows <= max_rows:
        return rows  # block_shape == full array dims is always layout-legal
    start = max_rows - (max_rows % _SUBLANE)
    for tr in range(start, _SUBLANE - 1, -_SUBLANE):
        if rows % tr == 0:
            return tr
    return None


def _copy_slab(x2d, tr):
    """Stream-copy a (rows, lanes) slab with row-tiles of size tr."""
    rows, lanes = x2d.shape
    grid = (rows // tr,)
    return pl.pallas_call(
        _identity_copy_kernel,
        out_shape=jax.ShapeDtypeStruct((rows, lanes), x2d.dtype),
        grid_spec=pltpu.PrefetchScalarGridSpec(
            num_scalar_prefetch=0,
            grid=grid,
            in_specs=[pl.BlockSpec((tr, lanes), lambda i: (i, 0))],
            out_specs=pl.BlockSpec((tr, lanes), lambda i: (i, 0)),
        ),
        compiler_params=pltpu.CompilerParams(
            # 1-D parallel grid: lets v7x shard the stream across both TCs.
            dimension_semantics=("parallel",),
        ),
    )(x2d)


def _slab_factorization(n, itemsize):
    """Pick (lanes, rows, tile_rows) for a lane-dense slab covering n elements.

    Prefers wider lane dims (fewer, longer unmasked rows). Returns None if n is
    not a multiple of 128 or no clean row-tiling exists."""
    for lanes in _LANE_CANDIDATES:
        if n % lanes != 0:
            continue
        rows = n // lanes
        max_rows = max(_SUBLANE, _MAX_BLOCK_BYTES // (lanes * itemsize))
        tr = _pick_tile_rows(rows, max_rows)
        if tr is not None:
            return lanes, rows, tr
    return None


def _resolve_out_shape(x_shape, n_batch_dims, shape):
    """torch.view shape resolution: keep batch dims, reshape the rest."""
    batch = tuple(int(d) for d in x_shape[:n_batch_dims])
    rest = 1
    for d in x_shape[n_batch_dims:]:
        rest *= int(d)
    shape = tuple(int(s) for s in shape)
    neg = [i for i, s in enumerate(shape) if s == -1]
    if len(neg) > 1:
        raise ValueError("only one -1 allowed in view shape")
    known = 1
    for s in shape:
        if s != -1:
            known *= s
    if neg:
        if known == 0 or rest % known != 0:
            raise ValueError(f"cannot view trailing dims of size {rest} as {shape}")
        shape = shape[: neg[0]] + (rest // known,) + shape[neg[0] + 1 :]
    elif known != rest:
        raise ValueError(f"cannot view trailing dims of size {rest} as {shape}")
    return batch + shape


def view_pallas(x, n_batch_dims=1, shape=(-1, 1, 1)):
    """View/reshape backed by a Pallas identity-copy kernel."""
    out_shape = _resolve_out_shape(x.shape, n_batch_dims, shape)
    n = x.size
    if n == 0:
        return jnp.reshape(x, out_shape)

    itemsize = jnp.dtype(x.dtype).itemsize

    fact = _slab_factorization(n, itemsize)
    if fact is not None:
        # Fast path: no pad, no slice — only free metadata reshapes around a
        # single streaming copy (exactly 1 HBM read + 1 HBM write).
        lanes, rows, tr = fact
        x2d = jnp.reshape(x, (rows, lanes))
        out2d = _copy_slab(x2d, tr)
        return jnp.reshape(out2d, out_shape)

    # Ragged fallback: pad the flat array to an aligned lane-dense slab,
    # copy, then slice off the tail.
    max_rows = max(_SUBLANE, _MAX_BLOCK_BYTES // (_LANES * itemsize))
    rows = pl.cdiv(n, _LANES)
    pad_unit = _SUBLANE if rows <= max_rows else 1024
    rows_padded = pl.cdiv(rows, pad_unit) * pad_unit
    padded_n = rows_padded * _LANES
    x_flat = jnp.ravel(x)
    if padded_n != n:
        x_flat = jnp.pad(x_flat, (0, padded_n - n))
    x2d = jnp.reshape(x_flat, (rows_padded, _LANES))
    tr = _pick_tile_rows(rows_padded, max_rows)
    out2d = _copy_slab(x2d, tr)
    return jnp.reshape(jnp.reshape(out2d, (-1,))[:n], out_shape)


class ViewPallas:
    """Mirror of the PyTorch View module, backed by the Pallas kernel."""

    def __init__(self, n_batch_dims=1, shape=(-1, 1, 1)):
        self.shape = tuple(shape)
        self.n_batch_dims = n_batch_dims

    def __call__(self, x):
        return view_pallas(x, self.n_batch_dims, self.shape)

    def __repr__(self):
        return f"View(n_batch_dims={self.n_batch_dims}, shape={self.shape})"


if __name__ == "__main__":
    key = jax.random.PRNGKey(0)
    k1, k2 = jax.random.split(key)

    # NCHW-like input: batch=2, channels=4, spatial=16x16 (numel=2048, %128==0
    # -> fast no-pad path).
    x = jax.random.normal(k1, (2, 4, 16, 16), dtype=jnp.float32)

    # Default View(): keep 1 batch dim, view the rest as (-1, 1, 1).
    module = ViewPallas()
    y = jax.block_until_ready(module(x))
    y_ref = jnp.reshape(x, (2, 4 * 16 * 16, 1, 1))
    assert y.shape == y_ref.shape and y.dtype == x.dtype
    assert bool(jnp.array_equal(y, y_ref)), "mismatch vs reference view (default)"

    # Two batch dims, flatten spatial.
    module2 = ViewPallas(n_batch_dims=2, shape=(-1,))
    y2 = jax.block_until_ready(module2(x))
    assert bool(jnp.array_equal(y2, jnp.reshape(x, (2, 4, 256))))

    # bf16 input exercises the dtype-aware tile/alignment logic.
    xb = x.astype(jnp.bfloat16)
    yb = jax.block_until_ready(module2(xb))
    assert yb.dtype == jnp.bfloat16
    assert bool(jnp.array_equal(yb, jnp.reshape(xb, (2, 4, 256))))

    # Ragged size (numel % 128 != 0) exercises the padded fallback path.
    x3 = jax.random.normal(k2, (3, 5, 7), dtype=jnp.float32)
    module3 = ViewPallas(n_batch_dims=1, shape=(-1, 1, 1))
    y3 = jax.block_until_ready(module3(x3))
    assert bool(jnp.array_equal(y3, jnp.reshape(x3, (3, 35, 1, 1))))

    print("KERNEL_OK")
</pallas_src>

<mosaic_0001>
module attributes {stable_mosaic.version = 11 : i64} {
  func.func @_identity_copy_kernel(%arg0: i32, %arg1: memref<2x1024xf32, #tpu.memory_space<vmem>>, %arg2: memref<2x1024xf32, #tpu.memory_space<vmem>>) attributes {dimension_semantics = [#tpu.dimension_semantics<parallel>], iteration_bounds = array<i64: 1>, scalar_prefetch = 0 : i64, scratch_operands = 0 : i64, tpu.core_type = #tpu.core_type<tc>, window_params = [{transform_indices = @transform_0, window_bounds = array<i64: 2, 1024>}, {transform_indices = @transform_1, window_bounds = array<i64: 2, 1024>}]} {
    %c0 = arith.constant 0 : index
    %c0_0 = arith.constant 0 : index
    %0 = vector.load %arg1[%c0, %c0_0] : memref<2x1024xf32, #tpu.memory_space<vmem>>, vector<2x1024xf32>
    %c0_1 = arith.constant 0 : index
    %c0_2 = arith.constant 0 : index
    %1 = vector.load %arg2[%c0_1, %c0_2] : memref<2x1024xf32, #tpu.memory_space<vmem>>, vector<2x1024xf32>
    tpu.vector_store %arg2[%c0_1, %c0_2], %0 {strides = array<i32>} : memref<2x1024xf32, #tpu.memory_space<vmem>>, vector<2x1024xf32>,
    return
  }
  func.func @transform_0(%arg0: i32) -> (i32, i32) {
    %c0_i32 = arith.constant 0 : i32
    %c0_i32_0 = arith.constant 0 : i32
    return %arg0, %c0_i32 : i32, i32
  }
  func.func @transform_1(%arg0: i32) -> (i32, i32) {
    %c0_i32 = arith.constant 0 : i32
    %c0_i32_0 = arith.constant 0 : i32
    return %arg0, %c0_i32 : i32, i32
  }
}

</mosaic_0001>

<llo_original>
// kernel: tpu_custom_call.1
$region0: #{tpu_custom_call.1}
  #allocation0 [shape = 'u32[]', space=smem, size = 0x4, offset = 0x4, fixed_abs, tag = 'smem constant byte address 0x4 - core index']
  #allocation1 [shape = 'u32[144,128]{1,0:T(1,128)}', space=vmem, size = 0x12000, scoped, tag = 'internal scratch']
  %s0 = inlined_call_operand.hbm [shape: f32[2,1024], index: 0, kind: input, shape index: {}]
  %s1 = inlined_call_operand.hbm [shape: f32[2,1024], index: 1, kind: output, shape index: {}]
  %s2 = sld [smem:[#allocation0]]
  $region18: #{tpu_custom_call.1} parent=0
    _
  %s4 = ssub.s32 1, %s2
  %s5 = scalar_select 0, %s4, %s2
  $region1: #{tpu_custom_call.1} parent=0
    #allocation2 [shape = 'u8[8192]{0}', space=vmem, size = 0x2000, scoped, tag = 'input window, operand 0, single buffered']
    #allocation3 [shape = 's32[1]{0}', space=sflag, size = 0x4, scoped, tag = 'scoped memory for tpu_custom_call.1']
    #allocation4 [shape = 's32[1]{0}', space=sflag, size = 0x4, scoped, tag = 'scoped memory for tpu_custom_call.1']
    #allocation5 [shape = 'u8[8192]{0}', space=vmem, size = 0x2000, scoped, tag = 'output window, operand 0, single buffered']
    %6 = vsyncpa [#allocation3], 0
    %7 = vsyncpa [#allocation4], 0
    // Predicated region
    $region2: #{tpu_custom_call.1} parent=1 // pred_check
      _
    $region3: #{tpu_custom_call.1} parent=1 // pred_check_branch
      %9 = sbr.rel (0) target = $region5
    $region4: #{tpu_custom_call.1} parent=1 // pred_region
      %s11 = ssub.s32 256, 256
      %12 = vsyncadd [#allocation3], %s11
      %s14 = sshll.u32 [#allocation2], 4
      %s15 = int_to_ptr.vmem [resolvable:$true] %s14
      %17 = dma.hbm_to_vmem [thread:$0]  %s0, 256, %s15, [#allocation3]
    $region5: #{tpu_custom_call.1} parent=1 // pred_fallthru
      _
    // Predicated region
    $region6: #{tpu_custom_call.1} parent=1 // pred_check
      _
    $region7: #{tpu_custom_call.1} parent=1 // pred_check_branch
      %19 = sbr.rel (0) target = $region9
    $region8: #{tpu_custom_call.1} parent=1 // pred_region
      %20 = dma.done [#allocation3], 256
    $region9: #{tpu_custom_call.1} parent=1 // pred_fallthru
      _
    %v21 = vld [vmem:[#allocation2] sm:$0xff]
    %v22 = vld [vmem:[#allocation2 + $0x8] sm:$0xff]
    %23 = vst [vmem:[#allocation5] sm:$0xff] %v21
    %24 = vst [vmem:[#allocation5 + $0x8] sm:$0xff] %v22
    // Predicated region
    $region10: #{tpu_custom_call.1} parent=1 // pred_check
      _
    $region11: #{tpu_custom_call.1} parent=1 // pred_check_branch
      %26 = sbr.rel (0) target = $region13
    $region12: #{tpu_custom_call.1} parent=1 // pred_region
      %s28 = ssub.s32 256, 256
      %29 = vsyncadd [#allocation4], %s28
      %s31 = sshll.u32 [#allocation5], 4
      %s32 = int_to_ptr.vmem [resolvable:$true] %s31
      %34 = dma.vmem_to_hbm [thread:$0]  %s32, 256, %s1, [#allocation4]
    $region13: #{tpu_custom_call.1} parent=1 // pred_fallthru
      _
    // Predicated region
    $region14: #{tpu_custom_call.1} parent=1 // pred_check
      _
    $region15: #{tpu_custom_call.1} parent=1 // pred_check_branch
      %36 = sbr.rel (0) target = $region17
    $region16: #{tpu_custom_call.1} parent=1 // pred_region
      %37 = dma.done [#allocation4], 256
    $region17: #{tpu_custom_call.1} parent=1 // pred_fallthru
      _
    %38 = vsyncpa [#allocation3], 1
    %39 = vsyncpa [#allocation4], 1

</llo_original>
